<compile_context>
chip_gen: v5e
topology: v5e:2x2
jax: 0.10.0
libtpu: 0.0.40
codegen_flags: <defaults>
</compile_context>

<pallas_src>
import functools
import numpy as np
import jax
import jax.numpy as jnp
from jax.experimental import pallas as pl
from jax.experimental.pallas import tpu as pltpu

EPS_GN = 1e-8   # GroupNorm eps used by select_norm('ln', ...)
EPS_BN = 1e-5   # BatchNorm1d default eps

_PAR = pltpu.CompilerParams(dimension_semantics=("parallel",))


# ----------------------------------------------------------------------------
# Kernel bodies
# ----------------------------------------------------------------------------

def _norm_conv_kernel(x_ref, w_ref, c_ref, o_ref):
    """GroupNorm(1, C_in) fused with 1x1 conv.  Affine + conv are pre-folded:
    y = (W*g) @ xn + W@b, with xn the un-affine normalized input.
    Two-pass mean/var kept here on purpose: the input is raw (possibly
    large-mean) data, where E[x^2]-mu^2 loses precision."""
    x = x_ref[0].astype(jnp.float32)                       # (Cin, L)
    mu = jnp.mean(x)
    var = jnp.mean((x - mu) ** 2)
    xn = (x - mu) * jax.lax.rsqrt(var + EPS_GN)
    y = jnp.dot(w_ref[...], xn.astype(w_ref.dtype),
                preferred_element_type=jnp.float32) + c_ref[...]
    o_ref[0] = y.astype(o_ref.dtype)


def _vis_kernel(x_ref, ep_ref, pw_ref, wo_ref, bo_ref, o_ref, *, tp, t_valid):
    """Entire visual_conv stack, channels-last, batch folded into rows.
    x_ref: (B*Tp, 768); ep_ref: (5, 8, 768) rows = [s1, t1, s2, t2, w_prev,
    w_center, w_next, prelu_alpha]; pw_ref: (5, 768, 768) = pw_w^T (bf16);
    wo_ref: (768, N_out) = out conv weight^T (bf16); bo_ref: (1, N_out)."""
    x = x_ref[...].astype(jnp.float32)                     # (B*Tp, C)
    btp = x.shape[0]
    row = jax.lax.broadcasted_iota(jnp.int32, (btp, 1), 0)
    t = row % tp                                           # time index within each batch
    prev_ok = t >= 1                                       # zero-pad at t=0, blocks cross-batch leak
    next_ok = t < (t_valid - 1)                            # zero-pad at t=T-1, blocks cross-batch leak
    for l in range(ep_ref.shape[0]):
        p = ep_ref[l].astype(jnp.float32)                  # (8, C)
        s1, t1 = p[0:1], p[1:2]
        s2, t2 = p[2:3], p[3:4]
        w_prev, w_cen, w_next, alpha = p[4:5], p[5:6], p[6:7], p[7:8]
        y = jnp.maximum(x, 0.0)                            # ReLU
        y = y * s1 + t1                                    # BatchNorm1d (eval, fused)
        y_prev = jnp.where(prev_ok, pltpu.roll(y, 1, axis=0), 0.0)
        y_next = jnp.where(next_ok, pltpu.roll(y, btp - 1, axis=0), 0.0)
        y = w_prev * y_prev + w_cen * y + w_next * y_next  # depthwise conv k=3, pad=1
        y = jnp.where(y >= 0.0, y, alpha * y)              # PReLU
        y = y * s2 + t2                                    # BatchNorm1d (eval, fused)
        y = jnp.dot(y.astype(pw_ref.dtype), pw_ref[l],     # 1x1 conv (no bias)
                    preferred_element_type=jnp.float32)
        x = x + y                                          # residual
    out = jnp.dot(x.astype(wo_ref.dtype), wo_ref[...],     # 768 -> N_out conv + bias
                  preferred_element_type=jnp.float32) + bo_ref[...]
    o_ref[...] = out.astype(o_ref.dtype)


def _dual_kernel(x_ref, vpe_ref, pe_ref, w1_ref, w2_ref, w3_ref, vec_ref,
                 wc_ref, cb_ref, alpha_ref, o_ref):
    """All Cross_Dual_Computation_Block layers + PReLU + 1x1 conv2d, per batch,
    on the flattened (N, K*S) feature map.
    vec_ref: (L, N, 8) packed per layer as [b1, b2, gi, bi, go, bo, 0, 0].
    cb_ref: (N*spks, 1) conv2d bias; alpha_ref: (1,) PReLU alpha in SMEM."""
    x = x_ref[0].astype(jnp.float32)                       # (N, M)
    pe = pe_ref[...].astype(jnp.float32)                   # (N, M)  (bf16 in HBM)
    vpe_bf = vpe_ref[0]                                    # (N, S)  already bf16
    Nc, M = x.shape
    S = vpe_bf.shape[1]
    K = M // S
    bf = w1_ref.dtype
    for l in range(w1_ref.shape[0]):
        vec = vec_ref[l]                                   # (N, 8)
        b1, b2 = vec[:, 0:1], vec[:, 1:2]
        gi, bi = vec[:, 2:3], vec[:, 3:4]
        go, bo = vec[:, 4:5], vec[:, 5:6]
        x1 = x + pe                                        # x = x + pos2d(x)
        # intra stand-in: per-position Linear + ReLU over channels
        intra = jnp.dot(w1_ref[l], x1.astype(bf),
                        preferred_element_type=jnp.float32) + b1
        intra = jnp.maximum(intra, 0.0)
        mu = jnp.mean(intra)                               # GroupNorm(1, N), single pass
        var = jnp.maximum(jnp.mean(intra * intra) - mu * mu, 0.0)
        intra = (intra - mu) * jax.lax.rsqrt(var + EPS_GN) * gi + bi
        intra = intra + x1                                 # skip_around_intra
        # inter stand-in: cross Linear over channels conditioned on visual stream.
        # W3 @ vpe + b2 is computed once on (N, S) and broadcast across the K
        # chunks without materializing a separate (N, K*S) tensor.
        vb = jnp.dot(w3_ref[l], vpe_bf,
                     preferred_element_type=jnp.float32) + b2        # (N, S)
        lin = jnp.dot(w2_ref[l], intra.astype(bf),
                      preferred_element_type=jnp.float32)            # (N, M)
        if S % 128 == 0:
            inter = (lin.reshape(Nc, K, S) + vb[:, None, :]).reshape(Nc, M)
        else:
            inter = jnp.concatenate(
                [lin[:, k * S:(k + 1) * S] + vb for k in range(K)], axis=1)
        inter = jnp.maximum(inter, 0.0)
        mu2 = jnp.mean(inter)                              # GroupNorm(1, N), single pass
        var2 = jnp.maximum(jnp.mean(inter * inter) - mu2 * mu2, 0.0)
        inter = (inter - mu2) * jax.lax.rsqrt(var2 + EPS_GN) * go + bo
        x = inter + intra
    alpha = alpha_ref[0]                                   # PReLU (single SMEM scalar)
    y = jnp.where(x >= 0.0, x, alpha * x)
    out = jnp.dot(wc_ref[...], y.astype(wc_ref.dtype),     # conv2d 1x1: N -> N*spks
                  preferred_element_type=jnp.float32) + cb_ref[...]
    o_ref[0] = out.astype(o_ref.dtype)


def _head_kernel(x_ref, wo_ref, wg_ref, we_ref, hb_ref, o_ref):
    """tanh(conv1x1) * sigmoid(conv1x1) -> end 1x1 conv -> ReLU, on one L tile.
    hb_ref: (N, 2) packed [out_bias, gate_bias]."""
    x = x_ref[0].astype(jnp.float32)
    xb = x.astype(wo_ref.dtype)
    t = jnp.tanh(jnp.dot(wo_ref[...], xb, preferred_element_type=jnp.float32)
                 + hb_ref[:, 0:1])
    g = jax.nn.sigmoid(jnp.dot(wg_ref[...], xb, preferred_element_type=jnp.float32)
                       + hb_ref[:, 1:2])
    y = jnp.dot(we_ref[...], (t * g).astype(we_ref.dtype),
                preferred_element_type=jnp.float32)
    o_ref[0] = jnp.maximum(y, 0.0).astype(o_ref.dtype)


# ----------------------------------------------------------------------------
# pallas_call wrappers
# ----------------------------------------------------------------------------

def norm_conv(x, w, c):
    # TODO(synk): at production L, tile L (mult of 128) with a two-pass global
    #             GroupNorm (stats pass + normalize pass).
    B, Cin, L = x.shape
    Cout = w.shape[0]
    return pl.pallas_call(
        _norm_conv_kernel,
        out_shape=jax.ShapeDtypeStruct((B, Cout, L), jnp.float32),
        grid=(B,),
        in_specs=[pl.BlockSpec((1, Cin, L), lambda b: (b, 0, 0)),
                  pl.BlockSpec((Cout, Cin), lambda b: (0, 0)),
                  pl.BlockSpec((Cout, 1), lambda b: (0, 0))],
        out_specs=pl.BlockSpec((1, Cout, L), lambda b: (b, 0, 0)),
        compiler_params=_PAR,
    )(x, w, c)


def visual_path(video_flat, vp, tp, t_valid):
    """video_flat: (B*Tp, 768) channels-last, per-batch time zero-padded to Tp."""
    BTp, C = video_flat.shape
    Nout = vp['woutT'].shape[1]
    kern = functools.partial(_vis_kernel, tp=tp, t_valid=t_valid)
    return pl.pallas_call(
        kern,
        out_shape=jax.ShapeDtypeStruct((BTp, Nout), jnp.float32),
        grid=(1,),
        in_specs=[pl.BlockSpec((BTp, C), lambda i: (0, 0)),
                  pl.BlockSpec(vp['ep'].shape, lambda i: (0, 0, 0)),
                  pl.BlockSpec(vp['pwT'].shape, lambda i: (0, 0, 0)),
                  pl.BlockSpec(vp['woutT'].shape, lambda i: (0, 0)),
                  pl.BlockSpec(vp['bout'].shape, lambda i: (0, 0))],
        out_specs=pl.BlockSpec((BTp, Nout), lambda i: (0, 0)),
        compiler_params=pltpu.CompilerParams(dimension_semantics=("arbitrary",)),
    )(video_flat, vp['ep'], vp['pwT'], vp['woutT'], vp['bout'])


def dual_stack(x2, vpe_bf, pe_flat_bf, dp):
    B, N, M = x2.shape
    S = vpe_bf.shape[2]
    Lyr = dp['w1'].shape[0]
    NspkN = dp['wc'].shape[0]
    return pl.pallas_call(
        _dual_kernel,
        out_shape=jax.ShapeDtypeStruct((B, NspkN, M), jnp.float32),
        grid=(B,),
        in_specs=[pl.BlockSpec((1, N, M), lambda b: (b, 0, 0)),
                  pl.BlockSpec((1, N, S), lambda b: (b, 0, 0)),
                  pl.BlockSpec((N, M), lambda b: (0, 0)),
                  pl.BlockSpec((Lyr, N, N), lambda b: (0, 0, 0)),
                  pl.BlockSpec((Lyr, N, N), lambda b: (0, 0, 0)),
                  pl.BlockSpec((Lyr, N, N), lambda b: (0, 0, 0)),
                  pl.BlockSpec((Lyr, N, 8), lambda b: (0, 0, 0)),
                  pl.BlockSpec((NspkN, N), lambda b: (0, 0)),
                  pl.BlockSpec((NspkN, 1), lambda b: (0, 0)),
                  pl.BlockSpec(memory_space=pltpu.MemorySpace.SMEM)],
        out_specs=pl.BlockSpec((1, NspkN, M), lambda b: (b, 0, 0)),
        compiler_params=_PAR,
    )(x2, vpe_bf, pe_flat_bf, dp['w1'], dp['w2'], dp['w3'], dp['vec'],
      dp['wc'], dp['cbias'], dp['alpha'])


def head(x, hp, lt=128):
    """Output head, tiled over L in 128-lane tiles (lane-dense stores)."""
    Bs, N, L = x.shape
    Cout = hp['we'].shape[0]
    Lp = int(np.ceil(L / lt) * lt)
    if Lp != L:
        x = jnp.pad(x, ((0, 0), (0, 0), (0, Lp - L)))
    out = pl.pallas_call(
        _head_kernel,
        out_shape=jax.ShapeDtypeStruct((Bs, Cout, Lp), jnp.float32),
        grid=(Bs, Lp // lt),
        in_specs=[pl.BlockSpec((1, N, lt), lambda b, t: (b, 0, t)),
                  pl.BlockSpec((N, N), lambda b, t: (0, 0)),
                  pl.BlockSpec((N, N), lambda b, t: (0, 0)),
                  pl.BlockSpec((Cout, N), lambda b, t: (0, 0)),
                  pl.BlockSpec((N, 2), lambda b, t: (0, 0))],
        out_specs=pl.BlockSpec((1, Cout, lt), lambda b, t: (b, 0, t)),
        compiler_params=pltpu.CompilerParams(
            dimension_semantics=("parallel", "parallel")),
    )(x, hp['wo'], hp['wg'], hp['we'], hp['hb'])
    return out[:, :, :L]


# ----------------------------------------------------------------------------
# Pure JAX / numpy glue (reshapes, segmentation, positional encodings)
# ----------------------------------------------------------------------------

def segmentation(x, K):
    B, N, L = x.shape
    P = K // 2
    gap = K - (P + L % K) % K
    if gap > 0:
        x = jnp.concatenate([x, jnp.zeros((B, N, gap), x.dtype)], axis=2)
    pad = jnp.zeros((B, N, P), x.dtype)
    x = jnp.concatenate([pad, x, pad], axis=2)
    x1 = x[:, :, :-P].reshape(B, N, -1, K)
    x2 = x[:, :, P:].reshape(B, N, -1, K)
    x = jnp.concatenate([x1, x2], axis=3).reshape(B, N, -1, K)
    return jnp.swapaxes(x, 2, 3), gap


def over_add(x, gap):
    B, N, K, S = x.shape
    P = K // 2
    x = jnp.swapaxes(x, 2, 3).reshape(B, N, -1, K * 2)
    x1 = x[:, :, :, :K].reshape(B, N, -1)[:, :, P:]
    x2 = x[:, :, :, K:].reshape(B, N, -1)[:, :, :-P]
    x = x1 + x2
    if gap > 0:
        x = x[:, :, :-gap]
    return x


def pos_enc_2d(N, K, S, dtype=jnp.float32):
    """PositionalEncodingPermute2D(N) for a [*, N, K, S] tensor -> (N, K, S)."""
    cp = int(np.ceil(N / 4) * 2)
    inv_freq = 1.0 / (10000.0 ** (np.arange(0, cp, 2).astype(np.float32) / cp))
    sin_x = np.einsum('i,j->ij', np.arange(K, dtype=np.float32), inv_freq)
    sin_y = np.einsum('i,j->ij', np.arange(S, dtype=np.float32), inv_freq)

    def get_emb(s):
        e = np.stack([np.sin(s), np.cos(s)], axis=-1)
        return e.reshape(s.shape[0], -1)

    emb_x = get_emb(sin_x)[:, None, :]                 # (K, 1, cp)
    emb_y = get_emb(sin_y)                             # (S, cp)
    emb = np.zeros((K, S, 2 * cp), dtype=np.float32)
    emb[:, :, :cp] = emb_x
    emb[:, :, cp:2 * cp] = emb_y
    pe = emb[:, :, :N]                                 # (K, S, N)
    return jnp.asarray(np.transpose(pe, (2, 0, 1)), dtype)   # (N, K, S)


# ----------------------------------------------------------------------------
# Parameters: raw synthetic init + host-side packing / fusion for the kernels
# ----------------------------------------------------------------------------

def init_params(key, in_ch, out_ch, num_spks, num_layers, vis_ch=768):
    keys = iter(jax.random.split(key, 128))
    nk = lambda: next(keys)

    def w(shape, fan_in):
        return jax.random.normal(nk(), shape, jnp.float32) / np.sqrt(fan_in)

    def gamma(n):
        return 1.0 + 0.1 * jax.random.normal(nk(), (n,), jnp.float32)

    def beta(n):
        return 0.1 * jax.random.normal(nk(), (n,), jnp.float32)

    def bn(n):   # rows: gamma, beta, running_mean, running_var -> (4, n)
        return jnp.stack([
            gamma(n), beta(n),
            0.1 * jax.random.normal(nk(), (n,), jnp.float32),
            1.0 + 0.1 * jnp.abs(jax.random.normal(nk(), (n,), jnp.float32)),
        ], axis=0)

    p = {'norm_g': gamma(in_ch), 'norm_b': beta(in_ch),
         'conv1d_w': w((out_ch, in_ch), in_ch)}
    p['vis_blocks'] = [{
        'bn1': bn(vis_ch),
        'dw_w': w((vis_ch, 3), 3),
        'prelu': jnp.float32(0.25),
        'bn2': bn(vis_ch),
        'pw_w': w((vis_ch, vis_ch), vis_ch),
    } for _ in range(5)]
    p['vis_out_w'] = w((out_ch, vis_ch), vis_ch)
    p['vis_out_b'] = beta(out_ch)
    p['dual_layers'] = [{
        'w1': w((out_ch, out_ch), out_ch), 'b1': beta(out_ch),
        'w2': w((out_ch, out_ch), out_ch), 'w3': w((out_ch, out_ch), out_ch),
        'b2': beta(out_ch),
        'gi': gamma(out_ch), 'bi': beta(out_ch),
        'go': gamma(out_ch), 'bo': beta(out_ch),
    } for _ in range(num_layers)]
    p['prelu_a'] = jnp.float32(0.25)
    p['conv2d_w'] = w((out_ch * num_spks, out_ch), out_ch)
    p['conv2d_b'] = beta(out_ch * num_spks)
    p['out_w'] = w((out_ch, out_ch), out_ch)
    p['out_b'] = beta(out_ch)
    p['gate_w'] = w((out_ch, out_ch), out_ch)
    p['gate_b'] = beta(out_ch)
    p['end_w'] = w((in_ch, out_ch), out_ch)
    return p


def pack_params(p, out_ch, num_spks, vis_ch=768):
    """Host-side precompute: BN scale/shift fusion, GroupNorm-affine folding into
    the front conv, per-layer bias packing, bf16 cast of MXU weights."""
    bf = jnp.bfloat16

    # front: y = (W * g) @ xn + (W @ b)
    front = {'w': (p['conv1d_w'] * p['norm_g'][None, :]).astype(bf),
             'c': (p['conv1d_w'] @ p['norm_b']).reshape(-1, 1)}

    # visual path (channels-last)
    ep_rows, pwT = [], []
    for blk in p['vis_blocks']:
        bn1, bn2, dw = blk['bn1'], blk['bn2'], blk['dw_w']
        s1 = bn1[0] / jnp.sqrt(bn1[3] + EPS_BN)
        t1 = bn1[1] - bn1[2] * s1
        s2 = bn2[0] / jnp.sqrt(bn2[3] + EPS_BN)
        t2 = bn2[1] - bn2[2] * s2
        alpha = jnp.full((vis_ch,), blk['prelu'], jnp.float32)
        ep_rows.append(jnp.stack([s1, t1, s2, t2,
                                  dw[:, 0], dw[:, 1], dw[:, 2], alpha], axis=0))
        pwT.append(blk['pw_w'].T)
    vis = {'ep': jnp.stack(ep_rows, 0),                      # (5, 8, 768) f32
           'pwT': jnp.stack(pwT, 0).astype(bf),              # (5, 768, 768) bf16
           'woutT': p['vis_out_w'].T.astype(bf),             # (768, out_ch) bf16
           'bout': p['vis_out_b'].reshape(1, -1)}            # (1, out_ch) f32

    # dual-path layers (stacked) + conv2d + PReLU
    z = jnp.zeros((out_ch,), jnp.float32)
    dual = {
        'w1': jnp.stack([l['w1'] for l in p['dual_layers']], 0).astype(bf),
        'w2': jnp.stack([l['w2'] for l in p['dual_layers']], 0).astype(bf),
        'w3': jnp.stack([l['w3'] for l in p['dual_layers']], 0).astype(bf),
        'vec': jnp.stack([jnp.stack([l['b1'], l['b2'], l['gi'], l['bi'],
                                     l['go'], l['bo'], z, z], axis=1)
                          for l in p['dual_layers']], 0),    # (L, N, 8) f32
        'wc': p['conv2d_w'].astype(bf),                      # (N*spks, N) bf16
        'cbias': p['conv2d_b'].reshape(-1, 1),               # (N*spks, 1) f32
        'alpha': jnp.reshape(p['prelu_a'], (1,)),            # (1,) f32 -> SMEM
    }

    head_p = {'wo': p['out_w'].astype(bf), 'wg': p['gate_w'].astype(bf),
              'we': p['end_w'].astype(bf),
              'hb': jnp.stack([p['out_b'], p['gate_b']], axis=1)}  # (N, 2) f32
    return {'front': front, 'vis': vis, 'dual': dual, 'head': head_p}


# ----------------------------------------------------------------------------
# Full forward pass
# ----------------------------------------------------------------------------

def cross_dual_path_forward(x, video, packed, K, num_spks):
    """x: [B, N_in, L]  video: [B, T_v, 768]  ->  [num_spks, B, N_in, L]"""
    B, N_in, L = x.shape
    fp, vp, dp, hp = packed['front'], packed['vis'], packed['dual'], packed['head']

    # select_norm('ln', in_ch, 3) + conv1d 1x1 (no bias), fused
    x = norm_conv(x, fp['w'], fp['c'])                       # [B, NO, L]
    # use_global_pos_enc = False (default) -> skipped

    x4, gap = segmentation(x, K)                             # [B, NO, K, S]
    _, NO, Kc, S = x4.shape

    # visual path: batch folded into sublanes, channels-last, time padded to x8
    _, Tv, C = video.shape
    Tp = int(np.ceil(Tv / 8) * 8)
    vpad = jnp.pad(video, ((0, 0), (0, Tp - Tv), (0, 0)))
    v_cl = visual_path(vpad.reshape(B * Tp, C), vp, Tp, Tv)  # [B*Tp, NO]
    v = jnp.swapaxes(v_cl.reshape(B, Tp, -1)[:, :Tv, :], 1, 2)   # [B, NO, Tv]
    if S > Tv:                                               # F.pad(..., 'replicate')
        v = jnp.concatenate([v, jnp.repeat(v[:, :, -1:], S - Tv, axis=2)], axis=2)
    elif S < Tv:
        v = v[:, :, :S]

    pe = pos_enc_2d(NO, Kc, S, jnp.float32)                  # (NO, K, S)
    # pe / vpe travel in bf16 (half the resident VMEM); pe is added back in f32,
    # vpe is only ever consumed by a bf16 MXU matmul inside the kernel.
    pe_flat_bf = pe.reshape(NO, Kc * S).astype(jnp.bfloat16)
    vpe_bf = (v + pe[:, Kc // 2, :][None]).astype(jnp.bfloat16)   # (B, NO, S)

    # all dual-path layers + PReLU + conv2d in one fused kernel
    x2 = dual_stack(x4.reshape(B, NO, Kc * S), vpe_bf, pe_flat_bf, dp)

    x4b = x2.reshape(B, NO * num_spks, Kc, S).reshape(B * num_spks, NO, Kc, S)
    x3 = over_add(x4b, gap)                                  # [B*spks, NO, L]

    out = head(x3, hp)                                       # tanh*sigmoid gate, end conv, ReLU
    out = out.reshape(B, num_spks, N_in, L)
    return jnp.swapaxes(out, 0, 1)                           # [spks, B, N_in, L]


# ----------------------------------------------------------------------------

if __name__ == "__main__":
    B, IN, NO = 2, 8, 16
    K, num_spks, num_layers = 8, 2, 2
    L, Tv, VIS = 22, 6, 768

    key = jax.random.PRNGKey(0)
    kx, kv, kp = jax.random.split(key, 3)
    x = jax.random.normal(kx, (B, IN, L), jnp.float32)
    video = jax.random.normal(kv, (B, Tv, VIS), jnp.float32)
    params = init_params(kp, IN, NO, num_spks, num_layers, VIS)
    packed = pack_params(params, NO, num_spks, VIS)

    out = cross_dual_path_forward(x, video, packed, K, num_spks)
    out = jax.block_until_ready(out)

    assert out.shape == (num_spks, B, IN, L), out.shape
    assert bool(jnp.all(jnp.isfinite(out)))
    print("KERNEL_OK")
</pallas_src>

<mosaic_0001>
module attributes {stable_mosaic.version = 11 : i64} {
  func.func @_norm_conv_kernel(%arg0: i32, %arg1: memref<1x8x22xf32, #tpu.memory_space<vmem>>, %arg2: memref<16x8xbf16, #tpu.memory_space<vmem>>, %arg3: memref<16x1xf32, #tpu.memory_space<vmem>>, %arg4: memref<1x16x22xf32, #tpu.memory_space<vmem>>) attributes {dimension_semantics = [#tpu.dimension_semantics<parallel>], iteration_bounds = array<i64: 2>, scalar_prefetch = 0 : i64, scratch_operands = 0 : i64, tpu.core_type = #tpu.core_type<tc>, window_params = [{transform_indices = @transform_0, window_bounds = array<i64: 1, 8, 22>}, {pipeline_mode = #tpu.pipeline_mode<synchronous>, transform_indices = @transform_1, window_bounds = array<i64: 16, 8>}, {pipeline_mode = #tpu.pipeline_mode<synchronous>, transform_indices = @transform_2, window_bounds = array<i64: 16, 1>}, {transform_indices = @transform_3, window_bounds = array<i64: 1, 16, 22>}]} {
    %c0 = arith.constant 0 : index
    %c0_0 = arith.constant 0 : index
    %c0_1 = arith.constant 0 : index
    %0 = vector.load %arg1[%c0, %c0_0, %c0_1] : memref<1x8x22xf32, #tpu.memory_space<vmem>>, vector<1x8x22xf32>
    %1 = vector.shape_cast %0 : vector<1x8x22xf32> to vector<8x22xf32>
    %2 = vector.shape_cast %1 : vector<8x22xf32> to vector<1x8x22xf32>
    %cst = arith.constant dense<0.000000e+00> : vector<1xf32>
    %3 = vector.multi_reduction <add>, %2, %cst [1, 2] : vector<1x8x22xf32> to vector<1xf32>
    %4 = vector.shape_cast %3 : vector<1xf32> to vector<1x1x1xf32>
    %5 = vector.extract %4[0, 0, 0] : f32 from vector<1x1x1xf32>
    %cst_2 = arith.constant 1.760000e+02 : f32
    %6 = arith.divf %5, %cst_2 : f32
    %7 = vector.broadcast %6 : f32 to vector<8x22xf32>
    %8 = arith.subf %1, %7 : vector<8x22xf32>
    %9 = arith.mulf %8, %8 : vector<8x22xf32>
    %10 = vector.shape_cast %9 : vector<8x22xf32> to vector<1x8x22xf32>
    %cst_3 = arith.constant dense<0.000000e+00> : vector<1xf32>
    %11 = vector.multi_reduction <add>, %10, %cst_3 [1, 2] : vector<1x8x22xf32> to vector<1xf32>
    %12 = vector.shape_cast %11 : vector<1xf32> to vector<1x1x1xf32>
    %13 = vector.extract %12[0, 0, 0] : f32 from vector<1x1x1xf32>
    %cst_4 = arith.constant 1.760000e+02 : f32
    %14 = arith.divf %13, %cst_4 : f32
    %15 = vector.broadcast %6 : f32 to vector<8x22xf32>
    %16 = arith.subf %1, %15 : vector<8x22xf32>
    %cst_5 = arith.constant 9.99999993E-9 : f32
    %17 = arith.addf %14, %cst_5 : f32
    %18 = math.rsqrt %17 : f32
    %19 = vector.broadcast %18 : f32 to vector<8x22xf32>
    %20 = arith.mulf %16, %19 : vector<8x22xf32>
    %c0_6 = arith.constant 0 : index
    %c0_7 = arith.constant 0 : index
    %21 = vector.load %arg2[%c0_6, %c0_7] : memref<16x8xbf16, #tpu.memory_space<vmem>>, vector<16x8xbf16>
    %22 = arith.truncf %20 : vector<8x22xf32> to vector<8x22xbf16>
    %cst_8 = arith.constant dense<0.000000e+00> : vector<16x22xf32>
    %23 = tpu.matmul %21, %22, %cst_8 {dimension_numbers = #tpu.dot_dimension_numbers<[1], [0], [0], [1], [0, 0, 1, 1], [], []>} : vector<16x8xbf16>, vector<8x22xbf16>, vector<16x22xf32> -> vector<16x22xf32>
    %c0_9 = arith.constant 0 : index
    %c0_10 = arith.constant 0 : index
    %24 = vector.load %arg3[%c0_9, %c0_10] : memref<16x1xf32, #tpu.memory_space<vmem>>, vector<16x1xf32>
    %25 = vector.broadcast %24 : vector<16x1xf32> to vector<16x22xf32>
    %26 = arith.addf %23, %25 : vector<16x22xf32>
    %c0_11 = arith.constant 0 : index
    %c0_12 = arith.constant 0 : index
    %c0_13 = arith.constant 0 : index
    %27 = vector.load %arg4[%c0_11, %c0_12, %c0_13] : memref<1x16x22xf32, #tpu.memory_space<vmem>>, vector<1x16x22xf32>
    %28 = vector.shape_cast %27 : vector<1x16x22xf32> to vector<16x22xf32>
    %29 = vector.shape_cast %26 : vector<16x22xf32> to vector<1x16x22xf32>
    tpu.vector_store %arg4[%c0_11, %c0_12, %c0_13], %29 {strides = array<i32>} : memref<1x16x22xf32, #tpu.memory_space<vmem>>, vector<1x16x22xf32>,
    return
  }
  func.func @transform_0(%arg0: i32) -> (i32, i32, i32) {
    %c0_i32 = arith.constant 0 : i32
    %c0_i32_0 = arith.constant 0 : i32
    %c0_i32_1 = arith.constant 0 : i32
    return %arg0, %c0_i32, %c0_i32_0 : i32, i32, i32
  }
  func.func @transform_1(%arg0: i32) -> (i32, i32) {
    %c0_i32 = arith.constant 0 : i32
    %c0_i32_0 = arith.constant 0 : i32
    %c0_i32_1 = arith.constant 0 : i32
    return %c0_i32, %c0_i32_0 : i32, i32
  }
  func.func @transform_2(%arg0: i32) -> (i32, i32) {
    %c0_i32 = arith.constant 0 : i32
    %c0_i32_0 = arith.constant 0 : i32
    %c0_i32_1 = arith.constant 0 : i32
    return %c0_i32, %c0_i32_0 : i32, i32
  }
  func.func @transform_3(%arg0: i32) -> (i32, i32, i32) {
    %c0_i32 = arith.constant 0 : i32
    %c0_i32_0 = arith.constant 0 : i32
    %c0_i32_1 = arith.constant 0 : i32
    return %arg0, %c0_i32, %c0_i32_0 : i32, i32, i32
  }
}

</mosaic_0001>

<llo_original>
// kernel: tpu_custom_call.1
$region0: #{tpu_custom_call.1}
  #allocation0 [shape = 'u32[]', space=smem, size = 0x4, offset = 0x4, fixed_abs, tag = 'smem constant byte address 0x4 - core index']
  #allocation1 [shape = 'u32[72,128]{1,0:T(1,128)}', space=vmem, size = 0x9000, scoped, tag = 'internal scratch']
  %s0 = inlined_call_operand.vmem [shape: f32[2,8,22], index: 0, kind: input, shape index: {}]
  %s1 = inlined_call_operand.vmem [shape: bf16[16,8], index: 1, kind: input, shape index: {}]
  %s2 = inlined_call_operand.vmem [shape: f32[16,1], index: 2, kind: input, shape index: {}]
  %s3 = inlined_call_operand.hbm [shape: f32[2,16,22], index: 3, kind: output, shape index: {}]
  %s4 = sld [smem:[#allocation0]]
  $region45: #{tpu_custom_call.1} parent=0
    _
  %s6 = ssub.s32 1, %s4
  %s7 = scalar_select 0, %s6, %s4
  $region1: #{tpu_custom_call.1} parent=0
    #allocation2 [shape = 'u8[16384]{0}', space=vmem, size = 0x4000, scoped, tag = 'output window, operand 0']
    #allocation3 [shape = 's32[2]{0}', space=sflag, size = 0x8, scoped, tag = 'scoped memory for tpu_custom_call.1']
    %8 = vsyncpa [#allocation3], 0
    %s9 = scalar_lea.sflag [#allocation3], 1
    %10 = vsyncpa %s9, 0
    loop: start=0, step=1, limit=4
    $region2: #{tpu_custom_call.1} parent=1 // loop_pre_header
      _
    $region3: #{tpu_custom_call.1} parent=1 // loop_header
      %s12 = sphi 0, %s16
      %p13 = scmp.ge.s32.totalorder %s12, 4
      %s22 = sphi 0, %s24
      %s25 = sphi 0, %s22
      %s26 = sphi 0, %s25
      %s42 = sphi 0, %s26
      %s46 = sphi 0, %s46
      %s48 = sphi 0, %s46
      %s49 = sphi 0, %s48
      %s63 = sphi 0, %s49
      %s67 = sphi 0, %s67
      %s69 = sphi 0, %s67
      %s70 = sphi 0, %s69
      %s84 = sphi 0, %s70
      %s90 = sphi 0, %s92
      %s93 = sphi 0, %s90
      %s94 = sphi 0, %s93
      %s110 = sphi 0, %s94
    $region4: #{tpu_custom_call.1} parent=1 // loop_header_branch
      %15 = sbr.rel (%p13) target = $region8
    $region5: #{tpu_custom_call.1} parent=1 // loop_body
      %s17 = ssub.s32 %s12, 1
      %s18 = ssub.s32 %s12, 2
      %s19 = sadd.s32 %s12, 1
      %s20 = ssub.s32 %s12, %s19
      %p21 = scmp.eq.s32.totalorder %s20, 0
      %s23 = sadd.s32 %s22, 1
      %s24 = scalar_select %p21, %s22, %s23
      %p27 = pneg %p21
      %p28 = scmp.eq.s32.totalorder %s12, 1
      %p29 = por %p27, %p28
      %p30 = scmp.ne.s32.totalorder %s22, %s25
      %p31 = scmp.eq.s32.totalorder %s12, 0
      %p32 = por %p30, %p31
      %p33 = scmp.ne.s32.totalorder %s22, %s25
      %p34 = scmp.eq.s32.totalorder %s17, 1
      %p35 = por %p33, %p34
      %p36 = scmp.ne.s32.totalorder %s25, %s26
      %p37 = scmp.eq.s32.totalorder %s17, 0
      %p38 = por %p36, %p37
      %p39 = scmp.ne.s32.totalorder %s25, %s26
      %p40 = scmp.eq.s32.totalorder %s18, 1
      %p41 = por %p39, %p40
      %p43 = scmp.ne.s32.totalorder %s26, %s42
      %p44 = scmp.eq.s32.totalorder %s18, 0
      %p45 = por %p43, %p44
      %s47 = sadd.s32 %s46, 1
      %p50 = scmp.eq.s32.totalorder %s12, 1
      %p51 = scmp.ne.s32.totalorder %s46, %s48
      %p52 = scmp.eq.s32.totalorder %s12, 0
      %p53 = por %p51, %p52
      %p54 = scmp.ne.s32.totalorder %s46, %s48
      %p55 = scmp.eq.s32.totalorder %s17, 1
      %p56 = por %p54, %p55
      %p57 = scmp.ne.s32.totalorder %s48, %s49
      %p58 = scmp.eq.s32.totalorder %s17, 0
      %p59 = por %p57, %p58
      %p60 = scmp.ne.s32.totalorder %s48, %s49
      %p61 = scmp.eq.s32.totalorder %s18, 1
      %p62 = por %p60, %p61
      %p64 = scmp.ne.s32.totalorder %s49, %s63
      %p65 = scmp.eq.s32.totalorder %s18, 0
      %p66 = por %p64, %p65
      %s68 = sadd.s32 %s67, 1
      %p71 = scmp.eq.s32.totalorder %s12, 1
      %p72 = scmp.ne.s32.totalorder %s67, %s69
      %p73 = scmp.eq.s32.totalorder %s12, 0
      %p74 = por %p72, %p73
      %p75 = scmp.ne.s32.totalorder %s67, %s69
      %p76 = scmp.eq.s32.totalorder %s17, 1
      %p77 = por %p75, %p76
      %p78 = scmp.ne.s32.totalorder %s69, %s70
      %p79 = scmp.eq.s32.totalorder %s17, 0
      %p80 = por %p78, %p79
      %p81 = scmp.ne.s32.totalorder %s69, %s70
      %p82 = scmp.eq.s32.totalorder %s18, 1
      %p83 = por %p81, %p82
      %p85 = scmp.ne.s32.totalorder %s70, %s84
      %p86 = scmp.eq.s32.totalorder %s18, 0
      %p87 = por %p85, %p86
      %s88 = ssub.s32 %s12, %s19
      %p89 = scmp.eq.s32.totalorder %s88, 0
      %s91 = sadd.s32 %s90, 1
      %s92 = scalar_select %p89, %s90, %s91
      %p95 = pneg %p89
      %p96 = scmp.eq.s32.totalorder %s12, 1
      %p97 = por %p95, %p96
      %p98 = scmp.ne.s32.totalorder %s90, %s93
      %p99 = scmp.eq.s32.totalorder %s12, 0
      %p100 = por %p98, %p99
      %p101 = scmp.ne.s32.totalorder %s90, %s93
      %p102 = scmp.eq.s32.totalorder %s17, 1
      %p103 = por %p101, %p102
      %p104 = scmp.ne.s32.totalorder %s93, %s94
      %p105 = scmp.eq.s32.totalorder %s17, 0
      %p106 = por %p104, %p105
      %p107 = scmp.ne.s32.totalorder %s93, %s94
      %p108 = scmp.eq.s32.totalorder %s18, 1
      %p109 = por %p107, %p108
      %p111 = scmp.ne.s32.totalorder %s94, %s110
      %p112 = scmp.eq.s32.totalorder %s18, 0
      %p113 = por %p111, %p112
      %p114 = scmp.le.s32.totalorder 1, %s12
      %p115 = scmp.lt.s32.totalorder %s12, 3
      %p116 = pnand %p114, %p115
      %p117 = pneg %p116
      // Predicated region
      $region9: #{tpu_custom_call.1} parent=5 // pred_check
        _
      $region10: #{tpu_custom_call.1} parent=5 // pred_check_branch
        %119 = sbr.rel (%p116) target = $region12
      $region11: #{tpu_custom_call.1} parent=5 // pred_region
        %s120 = ssub.s32 %s12, 1
        // Predicated region
        $region13: #{tpu_custom_call.1} parent=11 // pred_check
          %p121 = pneg %p59
        $region14: #{tpu_custom_call.1} parent=11 // pred_check_branch
          %123 = sbr.rel (%p121) target = $region16
        $region15: #{tpu_custom_call.1} parent=11 // pred_region
          _
        $region16: #{tpu_custom_call.1} parent=11 // pred_fallthru
          _
        // Predicated region
        $region17: #{tpu_custom_call.1} parent=11 // pred_check
          %p124 = pneg %p80
        $region18: #{tpu_custom_call.1} parent=11 // pred_check_branch
          %126 = sbr.rel (%p124) target = $region20
        $region19: #{tpu_custom_call.1} parent=11 // pred_region
          _
        $region20: #{tpu_custom_call.1} parent=11 // pred_fallthru
          _
      $region12: #{tpu_custom_call.1} parent=5 // pred_fallthru
        _
      %p127 = scmp.lt.s32.totalorder %s12, 2
      // Predicated region
      $region21: #{tpu_custom_call.1} parent=5 // pred_check
        %p128 = pneg %p127
      $region22: #{tpu_custom_call.1} parent=5 // pred_check_branch
        %130 = sbr.rel (%p128) target = $region24
      $region23: #{tpu_custom_call.1} parent=5 // pred_region
        // Predicated region
        $region25: #{tpu_custom_call.1} parent=23 // pred_check
          %p131 = pneg %p32
        $region26: #{tpu_custom_call.1} parent=23 // pred_check_branch
          %133 = sbr.rel (%p131) target = $region28
        $region27: #{tpu_custom_call.1} parent=23 // pred_region
          %p134 = scmp.lt.s32.totalorder %s12, 1
          %s135 = scalar_select %p134, %s12, 1
          %s136 = smul.addr %s135, 8
          %s137 = scalar_lea.vmem %s0, %s136
        $region28: #{tpu_custom_call.1} parent=23 // pred_fallthru
          _
      $region24: #{tpu_custom_call.1} parent=5 // pred_fallthru
        _
      %p138 = scmp.le.s32.totalorder 1, %s12
      %p139 = scmp.lt.s32.totalorder %s12, 3
      %p140 = pnand %p138, %p139
      %p141 = pneg %p140
      // Predicated region
      $region29: #{tpu_custom_call.1} parent=5 // pred_check
        _
      $region30: #{tpu_custom_call.1} parent=5 // pred_check_branch
        %143 = sbr.rel (%p140) target = $region32
      $region31: #{tpu_custom_call.1} parent=5 // pred_region
        %s144 = ssub.s32 %s12, 1
        %p145 = scmp.lt.s32.totalorder %s17, 1
        %s146 = scalar_select %p145, %s17, 1
        %s147 = smul.addr %s146, 8
        %s148 = scalar_lea.vmem %s0, %s147
        %p149 = pneg %p38
        %p150 = pneg %p35
        %p151 = pneg %p59
        %p152 = pneg %p56
        %p153 = pneg %p80
        %p154 = pneg %p77
        %p155 = pneg %p106
        %p156 = pneg %p103
        %s157 = sand.u32 %s93, 1
        %s158 = scalar_lea.sflag [#allocation3], %s157
        %s159 = sand.u32 %s93, 1
        %s160 = smul.addr %s159, 16
        %s161 = scalar_lea.vmem [#allocation2], %s160
        %p162 = scmp.lt.s32.totalorder %s17, 1
        %s163 = scalar_select %p162, %s17, 1
        %s164 = smul.addr %s163, 8
        %s165 = scalar_lea.vmem %s0, %s164
        %v167 = vld [vmem:[%s165] sm:$0xff]
        %vm168 = vcmask 179200
        %v169 = vsel %vm168, %v167, 0.0
        %170 = vadd.xlane.f32.xlu0 %v169
        %v171 = vpop.xlane.xlu0 %170
        %v172 = vrot.slane %v171, 4
        %v173 = vadd.f32 %v171, %v172
        %v174 = vrot.slane %v173, 2
        %v175 = vadd.f32 %v173, %v174
        %v176 = vrot.slane %v175, 1
        %v177 = vadd.f32 %v175, %v176
        %s178 = vtos %v177
        %v179 = vrcp.pop 176.0
        %v180 = vmul.f32 176.0, %v179
        %v181 = vsub.f32 1.0, %v180
        %v182 = vmul.f32 %v179, %v181
        %v183 = vadd.f32 %v179, %v182
        %vm184 = vweird.f32 %v179
        %v185 = vsel %vm184, %v179, %v183
        %s186 = vtos %v185
        %s187 = smul.f32 %s178, %s186
        %v188 = vstv %s187
        %v189 = vsub.f32 %v167, %v188
        %v190 = vmul.f32 %v189, %v189
        %v191 = vsel %vm168, %v190, 0.0
        %192 = vadd.xlane.f32.xlu0 %v191
        %v193 = vpop.xlane.xlu0 %192
        %v194 = vrot.slane %v193, 4
        %v195 = vadd.f32 %v193, %v194
        %v196 = vrot.slane %v195, 2
        %v197 = vadd.f32 %v195, %v196
        %v198 = vrot.slane %v197, 1
        %v199 = vadd.f32 %v197, %v198
        %s200 = vtos %v199
        %v201 = vrcp.pop 176.0
        %v202 = vmul.f32 176.0, %v201
        %v203 = vsub.f32 1.0, %v202
        %v204 = vmul.f32 %v201, %v203
        %v205 = vadd.f32 %v201, %v204
        %vm206 = vweird.f32 %v201
        %v207 = vsel %vm206, %v201, %v205
        %s208 = vtos %v207
        %s209 = smul.f32 %s200, %s208
        %s210 = sadd.f32 %s209, 1e-08
        %v211 = vstv %s210
        %v212 = vrsqrt.pop %v211
        %v213 = vmul.f32 %v212, %v211
        %v214 = vmul.f32 %v213, %v212
        %v215 = vmul.f32 0.5, %v214
        %v216 = vsub.f32 1.5, %v215
        %v217 = vmul.f32 %v212, %v216
        %vm218 = vweird.f32 %v211
        %vm219 = vweird.f32 %v212
        %vm220 = vmor %vm218, %vm219
        %v221 = vsel %vm220, %v212, %v217
        %s222 = vtos %v221
        %v223 = vstv %s222
        %v224 = vmul.f32 %v189, %v223
        %v225 = vld [vmem:[%s1] sm:$0xf]
        %v226 = vld [vmem:[%s1 + $0x4] sm:$0xf]
        %v227 = vpack.c.bf16 %v224, %v224
        %v228 = vld [vmem:[%s2] sm:$0xff]
        %v229 = vld [vmem:[%s2 + $0x8] sm:$0xff]
        %231 = vset.pattern.permute.xlu0 0
        %232 = vperm.xlu0 %231, %v228
        %v233 = vpop.permute.xlu0 %232
        %236 = vset.pattern.permute.xlu0 0
        %237 = vperm.xlu0 %236, %v229
        %v238 = vpop.permute.xlu0 %237
        %v242 = vunpack.c.l.b16 %v225
        %v243 = vunpack.c.l.b16 %v226
        %v244 = vpack.c.b16 %v243, %v242
        %vm245 = vcmask 64512
        %v247 = vsel %vm245, %v244, 0
        %vm249 = vcmask 1043456
        %v251 = vsel %vm249, %v227, 0
        %253 = vmatpush.bf16.msra.mxu0 0
        %254 = vmatpush.bf16.msra.mxu0 0
        %255 = vmatpush.bf16.msra.mxu0 0
        %256 = vmatpush.bf16.msra.mxu0 0
        %257 = vmatpush.bf16.msra.mxu0 0
        %258 = vmatpush.bf16.msra.mxu0 0
        %259 = vmatpush.bf16.msra.mxu0 0
        %260 = vmatpush.bf16.msra.mxu0 %v251
        %261 = vmatmul.bf16.gmra.mxu0 %v247
        %v262 = vpop.f32.mrf.mxu0
        %v263 = vadd.f32 %v233, %v262
        %v264 = vpop.f32.mrf.mxu0
        %v265 = vadd.f32 %v238, %v264
        %266 = vdwg.mxu0
        %267 = vst.msk [vmem:[%s161] sm:$0xff] %vm168, %v263
        %268 = vst.msk [vmem:[%s161 + $0x8] sm:$0xff] %vm168, %v265
        %s269 = sand.u32 %s93, 1
        %s270 = scalar_lea.sflag [#allocation3], %s269
        %s271 = sand.u32 %s93, 1
        %s272 = smul.addr %s271, 16
        %s273 = scalar_lea.vmem [#allocation2], %s272
        // Predicated region
        $region33: #{tpu_custom_call.1} parent=31 // pred_check
          %p274 = pneg %p103
        $region34: #{tpu_custom_call.1} parent=31 // pred_check_branch
          %276 = sbr.rel (%p274) target = $region36
        $region35: #{tpu_custom_call.1} parent=31 // pred_region
          %278 = vsyncadd %s270, 0
          %s279 = smul.addr %s17, 2
          %s280 = smul.addr %s279, 8
          %s281 = scalar_lea.hbm %s3, %s280
          %s282 = sshll.u32 %s273, 4
          %s283 = int_to_ptr.vmem [resolvable:$true] %s282
          %s284 = sshll.u32 %s281, 4
          %s285 = int_to_ptr.hbm [resolvable:$true] %s284
          %290 = dma.vmem_to_hbm [thread:$0]  %s283, 256, %s285, %s270, 128, 128, 8
        $region36: #{tpu_custom_call.1} parent=31 // pred_fallthru
          _
      $region32: #{tpu_custom_call.1} parent=5 // pred_fallthru
        _
      %p291 = scmp.le.s32.totalorder 2, %s12
      // Predicated region
      $region37: #{tpu_custom_call.1} parent=5 // pred_check
        %p292 = pneg %p291
      $region38: #{tpu_custom_call.1} parent=5 // pred_check_branch
        %294 = sbr.rel (%p292) target = $region40
      $region39: #{tpu_custom_call.1} parent=5 // pred_region
        %s295 = ssub.s32 %s12, 2
        // Predicated region
        $region41: #{tpu_custom_call.1} parent=39 // pred_check
          %p296 = pneg %p109
        $region42: #{tpu_custom_call.1} parent=39 // pred_check_branch
          %298 = sbr.rel (%p296) target = $region44
        $region43: #{tpu_custom_call.1} parent=39 // pred_region
          %s299 = sand.u32 %s94, 1
          %s300 = scalar_lea.sflag [#allocation3], %s299
          %s301 = sand.u32 %s94, 1
          %s302 = smul.addr %s301, 16
          %s303 = scalar_lea.vmem [#allocation2], %s302
          %305 = dma.done %s300, 256
        $region44: #{tpu_custom_call.1} parent=39 // pred_fallthru
          _
      $region40: #{tpu_custom_call.1} parent=5 // pred_fallthru
        _
    $region6: #{tpu_custom_call.1} parent=1 // loop_footer
      %s16 = sadd.s32 1, %s12
    $region7: #{tpu_custom_call.1} parent=1 // loop_footer_branch
      %11 = sbr.rel target = $region3
    $region8: #{tpu_custom_call.1} parent=1 // loop_exit
      _
    %306 = vsyncpa [#allocation3], 1
    %s307 = scalar_lea.sflag [#allocation3], 1
    %308 = vsyncpa %s307, 1

</llo_original>
